<compile_context>
chip_gen: v6e
topology: v6e:2x2x1
jax: 0.10.0
libtpu: 0.0.40
codegen_flags: <defaults>
</compile_context>

<pallas_src>
import jax
import jax.numpy as jnp
from jax import lax
from jax.experimental import pallas as pl
from jax.experimental.pallas import tpu as pltpu

LANES = 128   # pad the 2-wide linear output up to a full lane tile
TB = 8        # batch rows per grid step (sublane-aligned)


def _mean_pool_linear_kernel(ids_ref,   # VMEM (TB, S)     int32  token ids (-1 = pad)
                             emb_ref,   # VMEM (V, E)      bf16   resident embedding table
                             w_ref,     # VMEM (E, LANES)  bf16   resident, lane-padded Linear weight
                             b_ref,     # VMEM (1, LANES)  f32    resident, lane-padded bias
                             out_ref):  # VMEM (TB, LANES) f32
    ids = ids_ref[...]                                   # (TB, S) int32
    tb, s = ids.shape
    v = emb_ref.shape[0]

    # Branchless fused gather + masked sum as a histogram matmul.
    # one_hot[b, j, vv] = (ids[b, j] == vv); padding ids (-1) give all-zero rows.
    iota_v = lax.broadcasted_iota(jnp.int32, (tb, s, v), 2)
    one_hot = (ids[:, :, None] == iota_v).astype(jnp.float32)   # (TB, S, V)
    hist = one_hot.sum(axis=1)                                  # (TB, V) per-vocab counts

    # Counts are small integers (<= S); bf16 is exact for S <= 256.
    hist_mat = hist.astype(jnp.bfloat16) if s <= 256 else hist

    # Sum of valid token embeddings: one MXU matmul, bf16 operands, f32 acc.
    summed = jnp.dot(hist_mat, emb_ref[...],
                     preferred_element_type=jnp.float32)        # (TB, E)

    # Masked mean (guard all-padding rows with max(cnt, 1)).
    cnt = (ids >= 0).astype(jnp.float32).sum(axis=1, keepdims=True)   # (TB, 1)
    t_hat = summed / jnp.maximum(cnt, 1.0)                            # (TB, E)

    # Batched lane-dense Linear: (TB, E) x (E, 128) bf16 -> f32, + bias.
    out = jnp.dot(t_hat.astype(jnp.bfloat16), w_ref[...],
                  preferred_element_type=jnp.float32) + b_ref[...]    # (TB, LANES)
    out_ref[...] = out


def model1_forward(ids, emb_table_bf16, w, bias, *, tb=TB):
    """ids: (B,S) int32 (-1 = pad); emb_table_bf16: (V,E) bf16;
    w: (E,2) f32; bias: (2,) f32  ->  (B,2) f32."""
    B, S = ids.shape
    V, E = emb_table_bf16.shape

    # Pad the batch up to a multiple of the batch tile with all-padding rows
    # (they produce `bias` and are sliced away below).
    n_tiles = pl.cdiv(B, tb)
    Bp = n_tiles * tb
    ids_p = jnp.full((Bp, S), -1, jnp.int32).at[:B, :].set(ids.astype(jnp.int32))

    # Lane-dense output: pad the (E, 2) linear to a full 128-lane tile.
    # W in bf16 (native MXU operand width), bias in f32.
    w_pad = jnp.zeros((E, LANES), jnp.bfloat16).at[:, :2].set(w.astype(jnp.bfloat16))
    b_pad = jnp.zeros((1, LANES), jnp.float32).at[0, :2].set(bias.astype(jnp.float32))

    grid_spec = pltpu.PrefetchScalarGridSpec(
        num_scalar_prefetch=0,
        grid=(n_tiles,),
        in_specs=[
            pl.BlockSpec((tb, S), lambda i: (i, 0)),        # ids tile
            pl.BlockSpec((V, E), lambda i: (0, 0)),         # resident embedding table
            pl.BlockSpec((E, LANES), lambda i: (0, 0)),     # resident weight
            pl.BlockSpec((1, LANES), lambda i: (0, 0)),     # resident bias
        ],
        out_specs=pl.BlockSpec((tb, LANES), lambda i: (i, 0)),
    )

    # VMEM budget: resident operands + per-tile double buffers, capped well under
    # v7x's 64 MiB physical VMEM.
    resident_bytes = V * E * 2 + E * LANES * 2 + LANES * 4
    tile_bytes = tb * S * 4 + tb * LANES * 4
    vmem_need = 2 * (resident_bytes + tile_bytes) + (1 << 20)
    vmem_limit = int(min(max(vmem_need, 16 * 2**20), 48 * 2**20))

    cost = pl.CostEstimate(
        flops=2 * Bp * S * V + 2 * Bp * V * E + 2 * Bp * E * LANES,
        transcendentals=0,
        bytes_accessed=(Bp * S * 4            # ids
                        + V * E * 2           # embedding table (read once)
                        + E * LANES * 2       # weight
                        + LANES * 4           # bias
                        + Bp * LANES * 4),    # output
    )

    out_padded = pl.pallas_call(
        _mean_pool_linear_kernel,
        out_shape=jax.ShapeDtypeStruct((Bp, LANES), jnp.float32),
        grid_spec=grid_spec,
        compiler_params=pltpu.CompilerParams(
            dimension_semantics=("parallel",),
            vmem_limit_bytes=vmem_limit),
        cost_estimate=cost,
    )(ids_p, emb_table_bf16, w_pad, b_pad)

    return out_padded[:B, :2]


def _reference(ids, emb_table_bf16, w, bias):
    emb = emb_table_bf16.astype(jnp.float32)
    gathered = emb[jnp.maximum(ids, 0)]                       # (B, S, E)
    mask = (ids >= 0).astype(jnp.float32)[..., None]          # (B, S, 1)
    summed = (gathered * mask).sum(axis=1)
    cnt = jnp.maximum(mask.sum(axis=1), 1.0)
    t_hat = summed / cnt
    return t_hat @ w + bias


if __name__ == "__main__":
    B, S, V, E = 4, 8, 64, 128  # small shapes consistent with the module

    key = jax.random.PRNGKey(0)
    k_emb, k_ids, k_pad, k_w, k_b = jax.random.split(key, 5)

    emb_table = jax.random.normal(k_emb, (V, E), jnp.float32).astype(jnp.bfloat16)
    base_ids = jax.random.randint(k_ids, (B, S), 0, V, dtype=jnp.int32)
    pad_mask = jax.random.bernoulli(k_pad, 0.3, (B, S))
    pad_mask = pad_mask.at[:, 0].set(False)          # guarantee >= 1 valid token per row
    ids = jnp.where(pad_mask, -1, base_ids)

    w = 0.1 * jax.random.normal(k_w, (E, 2), jnp.float32)     # Linear(E, 2) weight (transposed)
    bias = 0.1 * jax.random.normal(k_b, (2,), jnp.float32)

    out = jax.jit(model1_forward)(ids, emb_table, w, bias)
    out = jax.block_until_ready(out)

    ref = _reference(ids, emb_table, w, bias)
    if not jnp.allclose(out, ref, atol=1e-2, rtol=1e-2):
        raise AssertionError(
            f"Pallas kernel mismatch: max abs err = {jnp.max(jnp.abs(out - ref))}")

    print("KERNEL_OK")
</pallas_src>

<mosaic_0001>
module attributes {stable_mosaic.version = 11 : i64} {
  func.func @_mean_pool_linear_kernel(%arg0: i32, %arg1: memref<8x8xi32, #tpu.memory_space<vmem>>, %arg2: memref<64x128xbf16, #tpu.memory_space<vmem>>, %arg3: memref<128x128xbf16, #tpu.memory_space<vmem>>, %arg4: memref<1x128xf32, #tpu.memory_space<vmem>>, %arg5: memref<8x128xf32, #tpu.memory_space<vmem>>) attributes {dimension_semantics = [#tpu.dimension_semantics<parallel>], iteration_bounds = array<i64: 1>, scalar_prefetch = 0 : i64, scratch_operands = 0 : i64, tpu.core_type = #tpu.core_type<tc>, window_params = [{transform_indices = @transform_0, window_bounds = array<i64: 8, 8>}, {pipeline_mode = #tpu.pipeline_mode<synchronous>, transform_indices = @transform_1, window_bounds = array<i64: 64, 128>}, {pipeline_mode = #tpu.pipeline_mode<synchronous>, transform_indices = @transform_2, window_bounds = array<i64: 128, 128>}, {pipeline_mode = #tpu.pipeline_mode<synchronous>, transform_indices = @transform_3, window_bounds = array<i64: 1, 128>}, {transform_indices = @transform_4, window_bounds = array<i64: 8, 128>}]} {
    %c0 = arith.constant 0 : index
    %c0_0 = arith.constant 0 : index
    %0 = vector.load %arg1[%c0, %c0_0] : memref<8x8xi32, #tpu.memory_space<vmem>>, vector<8x8xi32>
    %1 = tpu.iota {dimensions = array<i32: 2>} : vector<8x8x64xi32>
    %2 = vector.shape_cast %0 : vector<8x8xi32> to vector<8x8x1xi32>
    %3 = vector.broadcast %2 : vector<8x8x1xi32> to vector<8x8x64xi32>
    %4 = arith.cmpi eq, %3, %1 : vector<8x8x64xi32>
    %5 = arith.extui %4 : vector<8x8x64xi1> to vector<8x8x64xi32>
    %6 = arith.sitofp %5 : vector<8x8x64xi32> to vector<8x8x64xf32>
    %cst = arith.constant dense<0.000000e+00> : vector<8x64xf32>
    %7 = vector.multi_reduction <add>, %6, %cst [1] : vector<8x8x64xf32> to vector<8x64xf32>
    %8 = arith.truncf %7 : vector<8x64xf32> to vector<8x64xbf16>
    %c0_1 = arith.constant 0 : index
    %c0_2 = arith.constant 0 : index
    %9 = vector.load %arg2[%c0_1, %c0_2] : memref<64x128xbf16, #tpu.memory_space<vmem>>, vector<64x128xbf16>
    %cst_3 = arith.constant dense<0.000000e+00> : vector<8x128xf32>
    %10 = tpu.matmul %8, %9, %cst_3 {dimension_numbers = #tpu.dot_dimension_numbers<[1], [0], [0], [1], [0, 0, 1, 1], [], []>} : vector<8x64xbf16>, vector<64x128xbf16>, vector<8x128xf32> -> vector<8x128xf32>
    %c0_i32 = arith.constant 0 : i32
    %11 = vector.broadcast %c0_i32 : i32 to vector<8x8xi32>
    %12 = arith.cmpi sge, %0, %11 : vector<8x8xi32>
    %13 = arith.extui %12 : vector<8x8xi1> to vector<8x8xi32>
    %14 = arith.sitofp %13 : vector<8x8xi32> to vector<8x8xf32>
    %cst_4 = arith.constant dense<0.000000e+00> : vector<8xf32>
    %15 = vector.multi_reduction <add>, %14, %cst_4 [1] : vector<8x8xf32> to vector<8xf32>
    %16 = vector.shape_cast %15 : vector<8xf32> to vector<8x1xf32>
    %cst_5 = arith.constant 1.000000e+00 : f32
    %17 = vector.broadcast %cst_5 : f32 to vector<8x1xf32>
    %18 = arith.maximumf %16, %17 : vector<8x1xf32>
    %19 = vector.broadcast %18 : vector<8x1xf32> to vector<8x128xf32>
    %20 = arith.divf %10, %19 : vector<8x128xf32>
    %21 = arith.truncf %20 : vector<8x128xf32> to vector<8x128xbf16>
    %c0_6 = arith.constant 0 : index
    %c0_7 = arith.constant 0 : index
    %22 = vector.load %arg3[%c0_6, %c0_7] : memref<128x128xbf16, #tpu.memory_space<vmem>>, vector<128x128xbf16>
    %cst_8 = arith.constant dense<0.000000e+00> : vector<8x128xf32>
    %23 = tpu.matmul %21, %22, %cst_8 {dimension_numbers = #tpu.dot_dimension_numbers<[1], [0], [0], [1], [0, 0, 1, 1], [], []>} : vector<8x128xbf16>, vector<128x128xbf16>, vector<8x128xf32> -> vector<8x128xf32>
    %c0_9 = arith.constant 0 : index
    %c0_10 = arith.constant 0 : index
    %24 = vector.load %arg4[%c0_9, %c0_10] : memref<1x128xf32, #tpu.memory_space<vmem>>, vector<1x128xf32>
    %25 = vector.broadcast %24 : vector<1x128xf32> to vector<8x128xf32>
    %26 = arith.addf %23, %25 : vector<8x128xf32>
    %c0_11 = arith.constant 0 : index
    %c0_12 = arith.constant 0 : index
    %27 = vector.load %arg5[%c0_11, %c0_12] : memref<8x128xf32, #tpu.memory_space<vmem>>, vector<8x128xf32>
    tpu.vector_store %arg5[%c0_11, %c0_12], %26 {strides = array<i32>} : memref<8x128xf32, #tpu.memory_space<vmem>>, vector<8x128xf32>,
    return
  }
  func.func @transform_0(%arg0: i32) -> (i32, i32) {
    %c0_i32 = arith.constant 0 : i32
    %c0_i32_0 = arith.constant 0 : i32
    return %arg0, %c0_i32 : i32, i32
  }
  func.func @transform_1(%arg0: i32) -> (i32, i32) {
    %c0_i32 = arith.constant 0 : i32
    %c0_i32_0 = arith.constant 0 : i32
    %c0_i32_1 = arith.constant 0 : i32
    return %c0_i32, %c0_i32_0 : i32, i32
  }
  func.func @transform_2(%arg0: i32) -> (i32, i32) {
    %c0_i32 = arith.constant 0 : i32
    %c0_i32_0 = arith.constant 0 : i32
    %c0_i32_1 = arith.constant 0 : i32
    return %c0_i32, %c0_i32_0 : i32, i32
  }
  func.func @transform_3(%arg0: i32) -> (i32, i32) {
    %c0_i32 = arith.constant 0 : i32
    %c0_i32_0 = arith.constant 0 : i32
    %c0_i32_1 = arith.constant 0 : i32
    return %c0_i32, %c0_i32_0 : i32, i32
  }
  func.func @transform_4(%arg0: i32) -> (i32, i32) {
    %c0_i32 = arith.constant 0 : i32
    %c0_i32_0 = arith.constant 0 : i32
    return %arg0, %c0_i32 : i32, i32
  }
}

</mosaic_0001>

<llo_original>
// kernel: model1_forward.1
$region0: #{model1_forward.1}
  #allocation0 [shape = 'u32[]', space=smem, size = 0x4, offset = 0x4, fixed_abs, tag = 'smem constant byte address 0x4 - core index']
  #allocation1 [shape = 'u32[144,128]{1,0:T(1,128)}', space=vmem, size = 0x12000, scoped, tag = 'internal scratch']
  %s0 = inlined_call_operand.vmem [shape: s32[8,8], index: 0, kind: input, shape index: {}]
  %s1 = inlined_call_operand.vmem [shape: bf16[64,128], index: 1, kind: input, shape index: {}]
  %s2 = inlined_call_operand.vmem [shape: bf16[128,128], index: 2, kind: input, shape index: {}]
  %s3 = inlined_call_operand.vmem [shape: f32[1,128], index: 3, kind: input, shape index: {}]
  %s4 = inlined_call_operand.vmem [shape: f32[8,128], index: 4, kind: output, shape index: {}]
  %s5 = sld [smem:[#allocation0]]
  $region26: #{model1_forward.1} parent=0
    _
  %s7 = ssub.s32 1, %s5
  %s8 = scalar_select 0, %s7, %s5
  // Predicated region
  $region2: #{model1_forward.1} parent=0 // pred_check
    _
  $region3: #{model1_forward.1} parent=0 // pred_check_branch
    %10 = sbr.rel (0) target = $region5
  $region4: #{model1_forward.1} parent=0 // pred_region
    _
  $region5: #{model1_forward.1} parent=0 // pred_fallthru
    _
  // Predicated region
  $region6: #{model1_forward.1} parent=0 // pred_check
    _
  $region7: #{model1_forward.1} parent=0 // pred_check_branch
    %12 = sbr.rel (0) target = $region9
  $region8: #{model1_forward.1} parent=0 // pred_region
    _
  $region9: #{model1_forward.1} parent=0 // pred_fallthru
    _
  // Predicated region
  $region10: #{model1_forward.1} parent=0 // pred_check
    _
  $region11: #{model1_forward.1} parent=0 // pred_check_branch
    %14 = sbr.rel (0) target = $region13
  $region12: #{model1_forward.1} parent=0 // pred_region
    _
  $region13: #{model1_forward.1} parent=0 // pred_fallthru
    _
  // Predicated region
  $region14: #{model1_forward.1} parent=0 // pred_check
    _
  $region15: #{model1_forward.1} parent=0 // pred_check_branch
    %16 = sbr.rel (0) target = $region17
  $region16: #{model1_forward.1} parent=0 // pred_region
    _
  $region17: #{model1_forward.1} parent=0 // pred_fallthru
    _
  %v18 = vld [vmem:[%s0] sm:$0xff]
  %v19 = vlaneseq
  %v20 = vand.u32 %v19, 127
  %v21 = vlaneseq
  %v22 = vshrl.u32 %v21, 7
  %v23 = vsub.s32 0, %v22
  %v24 = vrot.slane %v18, %v23
  %26 = vbcast.lane.b32.xlu0 %v24, 256
  %v27 = vpop.permute.xlu0 %26
  %v28 = vlaneseq
  %v29 = vshrl.u32 %v28, 7
  %v30 = vsub.s32 1, %v29
  %v31 = vrot.slane %v18, %v30
  %33 = vbcast.lane.b32.xlu0 %v31, 256
  %v34 = vpop.permute.xlu0 %33
  %v35 = vlaneseq
  %v36 = vshrl.u32 %v35, 7
  %v37 = vsub.s32 2, %v36
  %v38 = vrot.slane %v18, %v37
  %40 = vbcast.lane.b32.xlu0 %v38, 256
  %v41 = vpop.permute.xlu0 %40
  %v42 = vlaneseq
  %v43 = vshrl.u32 %v42, 7
  %v44 = vsub.s32 3, %v43
  %v45 = vrot.slane %v18, %v44
  %47 = vbcast.lane.b32.xlu0 %v45, 256
  %v48 = vpop.permute.xlu0 %47
  %v49 = vlaneseq
  %v50 = vshrl.u32 %v49, 7
  %v51 = vsub.s32 4, %v50
  %v52 = vrot.slane %v18, %v51
  %54 = vbcast.lane.b32.xlu0 %v52, 256
  %v55 = vpop.permute.xlu0 %54
  %v56 = vlaneseq
  %v57 = vshrl.u32 %v56, 7
  %v58 = vsub.s32 5, %v57
  %v59 = vrot.slane %v18, %v58
  %61 = vbcast.lane.b32.xlu0 %v59, 256
  %v62 = vpop.permute.xlu0 %61
  %v63 = vlaneseq
  %v64 = vshrl.u32 %v63, 7
  %v65 = vsub.s32 6, %v64
  %v66 = vrot.slane %v18, %v65
  %68 = vbcast.lane.b32.xlu0 %v66, 256
  %v69 = vpop.permute.xlu0 %68
  %v70 = vlaneseq
  %v71 = vshrl.u32 %v70, 7
  %v72 = vsub.s32 7, %v71
  %v73 = vrot.slane %v18, %v72
  %75 = vbcast.lane.b32.xlu0 %v73, 256
  %v76 = vpop.permute.xlu0 %75
  %vm77 = vcmp.eq.s32.totalorder %v27, %v20
  %vm78 = vcmp.eq.s32.totalorder %v34, %v20
  %vm79 = vcmp.eq.s32.totalorder %v41, %v20
  %vm80 = vcmp.eq.s32.totalorder %v48, %v20
  %vm81 = vcmp.eq.s32.totalorder %v55, %v20
  %vm82 = vcmp.eq.s32.totalorder %v62, %v20
  %vm83 = vcmp.eq.s32.totalorder %v69, %v20
  %vm84 = vcmp.eq.s32.totalorder %v76, %v20
  %v85 = vsel %vm77, 1, 0
  %v86 = vsel %vm78, 1, 0
  %v87 = vsel %vm79, 1, 0
  %v88 = vsel %vm80, 1, 0
  %v89 = vsel %vm81, 1, 0
  %v90 = vsel %vm82, 1, 0
  %v91 = vsel %vm83, 1, 0
  %v92 = vsel %vm84, 1, 0
  %v93 = vcvt.s32.f32 %v85
  %v94 = vcvt.s32.f32 %v86
  %v95 = vcvt.s32.f32 %v87
  %v96 = vcvt.s32.f32 %v88
  %v97 = vcvt.s32.f32 %v89
  %v98 = vcvt.s32.f32 %v90
  %v99 = vcvt.s32.f32 %v91
  %v100 = vcvt.s32.f32 %v92
  %vm101 = vcmask 523264
  %v102 = vsel %vm101, %v93, 0.0
  %v103 = vrot.slane %v102, 4
  %v104 = vadd.f32 %v102, %v103
  %v105 = vrot.slane %v104, 2
  %v106 = vadd.f32 %v104, %v105
  %v107 = vrot.slane %v106, 1
  %v108 = vadd.f32 %v106, %v107
  %v109 = vsel %vm101, %v94, 0.0
  %v110 = vrot.slane %v109, 4
  %v111 = vadd.f32 %v109, %v110
  %v112 = vrot.slane %v111, 2
  %v113 = vadd.f32 %v111, %v112
  %v114 = vrot.slane %v113, 1
  %v115 = vadd.f32 %v113, %v114
  %v116 = vsel %vm101, %v95, 0.0
  %v117 = vrot.slane %v116, 4
  %v118 = vadd.f32 %v116, %v117
  %v119 = vrot.slane %v118, 2
  %v120 = vadd.f32 %v118, %v119
  %v121 = vrot.slane %v120, 1
  %v122 = vadd.f32 %v120, %v121
  %v123 = vsel %vm101, %v96, 0.0
  %v124 = vrot.slane %v123, 4
  %v125 = vadd.f32 %v123, %v124
  %v126 = vrot.slane %v125, 2
  %v127 = vadd.f32 %v125, %v126
  %v128 = vrot.slane %v127, 1
  %v129 = vadd.f32 %v127, %v128
  %v130 = vsel %vm101, %v97, 0.0
  %v131 = vrot.slane %v130, 4
  %v132 = vadd.f32 %v130, %v131
  %v133 = vrot.slane %v132, 2
  %v134 = vadd.f32 %v132, %v133
  %v135 = vrot.slane %v134, 1
  %v136 = vadd.f32 %v134, %v135
  %v137 = vsel %vm101, %v98, 0.0
  %v138 = vrot.slane %v137, 4
  %v139 = vadd.f32 %v137, %v138
  %v140 = vrot.slane %v139, 2
  %v141 = vadd.f32 %v139, %v140
  %v142 = vrot.slane %v141, 1
  %v143 = vadd.f32 %v141, %v142
  %v144 = vsel %vm101, %v99, 0.0
  %v145 = vrot.slane %v144, 4
  %v146 = vadd.f32 %v144, %v145
  %v147 = vrot.slane %v146, 2
  %v148 = vadd.f32 %v146, %v147
  %v149 = vrot.slane %v148, 1
  %v150 = vadd.f32 %v148, %v149
  %v151 = vsel %vm101, %v100, 0.0
  %v152 = vrot.slane %v151, 4
  %v153 = vadd.f32 %v151, %v152
  %v154 = vrot.slane %v153, 2
  %v155 = vadd.f32 %v153, %v154
  %v156 = vrot.slane %v155, 1
  %v157 = vadd.f32 %v155, %v156
  %v158 = vpack.c.bf16 %v108, %v108
  %v159 = vpack.c.bf16 %v115, %v115
  %v160 = vpack.c.bf16 %v122, %v122
  %v161 = vpack.c.bf16 %v129, %v129
  %v162 = vpack.c.bf16 %v136, %v136
  %v163 = vpack.c.bf16 %v143, %v143
  %v164 = vpack.c.bf16 %v150, %v150
  %v165 = vpack.c.bf16 %v157, %v157
  %v166 = vld [vmem:[%s1] sm:$0xf]
  %v167 = vld [vmem:[%s1 + $0x4] sm:$0xf]
  %v168 = vld [vmem:[%s1 + $0x8] sm:$0xf]
  %v169 = vld [vmem:[%s1 + $0xc] sm:$0xf]
  %v170 = vld [vmem:[%s1 + $0x10] sm:$0xf]
  %v171 = vld [vmem:[%s1 + $0x14] sm:$0xf]
  %v172 = vld [vmem:[%s1 + $0x18] sm:$0xf]
  %v173 = vld [vmem:[%s1 + $0x1c] sm:$0xf]
  %v182 = vunpack.c.l.b16 %v158
  %v183 = vunpack.c.l.b16 %v159
  %v184 = vunpack.c.l.b16 %v160
  %v185 = vunpack.c.l.b16 %v161
  %v186 = vunpack.c.l.b16 %v162
  %v187 = vunpack.c.l.b16 %v163
  %v188 = vunpack.c.l.b16 %v164
  %v189 = vunpack.c.l.b16 %v165
  %vm190 = vcmask 1041409
  %v191 = vsel %vm190, %v183, %v182
  %vm192 = vcmask 1042434
  %v193 = vsel %vm192, %v184, %v191
  %vm194 = vcmask 1043459
  %v195 = vsel %vm194, %v185, %v193
  %vm196 = vcmask 1044484
  %v197 = vsel %vm196, %v186, %v195
  %vm198 = vcmask 1045509
  %v199 = vsel %vm198, %v187, %v197
  %vm200 = vcmask 1046534
  %v201 = vsel %vm200, %v188, %v199
  %vm202 = vcmask 1047559
  %v203 = vsel %vm202, %v189, %v201
  %v204 = vpack.c.b16 %v203, %v203
  %v213 = vunpack.c.l.b16 %v166
  %v214 = vunpack.c.l.b16 %v167
  %v215 = vunpack.c.l.b16 %v168
  %v216 = vunpack.c.l.b16 %v169
  %v217 = vunpack.c.l.b16 %v170
  %v218 = vunpack.c.l.b16 %v171
  %v219 = vunpack.c.l.b16 %v172
  %v220 = vunpack.c.l.b16 %v173
  %v221 = vpack.c.b16 %v214, %v213
  %v222 = vpack.c.b16 %v216, %v215
  %v223 = vpack.c.b16 %v218, %v217
  %v224 = vpack.c.b16 %v220, %v219
  %v230 = vsel %vm101, %v204, 0
  %232 = vmatprep.subr.bf16.mxu0 0
  %233 = vmatpush1.bf16.msra.mxu0 0
  %234 = vmatprep.subr.bf16.mxu0 0
  %235 = vmatpush1.bf16.msra.mxu0 0
  %236 = vmatprep.subr.bf16.mxu0 0
  %237 = vmatpush1.bf16.msra.mxu0 0
  %238 = vmatprep.subr.bf16.mxu0 0
  %239 = vmatpush1.bf16.msra.mxu0 0
  %240 = vmatprep.subr.bf16.mxu0 0
  %241 = vmatpush1.bf16.msra.mxu0 %v224
  %242 = vmatprep.subr.bf16.mxu0 0
  %243 = vmatpush1.bf16.msra.mxu0 %v223
  %244 = vmatprep.subr.bf16.mxu0 0
  %245 = vmatpush1.bf16.msra.mxu0 %v222
  %246 = vmatprep.subr.bf16.mxu0 0
  %247 = vmatpush1.bf16.msra.mxu0 %v221
  %248 = vmatprep.subr.bf16.mxu0 0
  %249 = vmatpush2.bf16.msra.mxu0 0
  %250 = vmatprep.subr.bf16.mxu0 0
  %251 = vmatpush2.bf16.msra.mxu0 0
  %252 = vmatprep.subr.bf16.mxu0 0
  %253 = vmatpush2.bf16.msra.mxu0 0
  %254 = vmatprep.subr.bf16.mxu0 0
  %255 = vmatpush2.bf16.msra.mxu0 0
  %256 = vmatprep.subr.bf16.mxu0 0
  %257 = vmatpush2.bf16.msra.mxu0 0
  %258 = vmatprep.subr.bf16.mxu0 0
  %259 = vmatpush2.bf16.msra.mxu0 0
  %260 = vmatprep.subr.bf16.mxu0 0
  %261 = vmatpush2.bf16.msra.mxu0 0
  %262 = vmatprep.subr.bf16.mxu0 0
  %263 = vmatpush2.bf16.msra.mxu0 0
  %264 = vmatprep.mubr.bf16.mxu0 0
  %265 = vmatmul.mubr.bf16.gmra.mxu0 %v230
  %v266 = vpop.f32.mrf.mxu0
  %v267 = vadd.f32 0.0, %v266
  %v268 = vpop.f32.mrf.mxu0
  %v269 = vpop.f32.mrf.mxu0
  %v270 = vpop.f32.mrf.mxu0
  %271 = vdwg.mxu0
  %vm272 = vcmp.ge.s32.totalorder %v18, 0
  %v273 = vsel %vm272, 1, 0
  %v274 = vcvt.s32.f32 %v273
  %vm275 = vcmask 64512
  %v276 = vsel %vm275, %v274, 0.0
  %277 = vadd.xlane.f32.xlu0 %v276
  %v278 = vpop.xlane.xlu0 %277
  %v279 = vmax.f32 %v278, 1.0
  %v280 = vrcp.pop %v279
  %v281 = vmul.f32 %v267, %v280
  %v282 = vpack.c.bf16 %v281, %v281
  %v283 = vld [vmem:[%s2] sm:$0xf]
  %v284 = vld [vmem:[%s2 + $0x4] sm:$0xf]
  %v285 = vld [vmem:[%s2 + $0x8] sm:$0xf]
  %v286 = vld [vmem:[%s2 + $0xc] sm:$0xf]
  %v287 = vld [vmem:[%s2 + $0x10] sm:$0xf]
  %v288 = vld [vmem:[%s2 + $0x14] sm:$0xf]
  %v289 = vld [vmem:[%s2 + $0x18] sm:$0xf]
  %v290 = vld [vmem:[%s2 + $0x1c] sm:$0xf]
  %v291 = vld [vmem:[%s2 + $0x20] sm:$0xf]
  %v292 = vld [vmem:[%s2 + $0x24] sm:$0xf]
  %v293 = vld [vmem:[%s2 + $0x28] sm:$0xf]
  %v294 = vld [vmem:[%s2 + $0x2c] sm:$0xf]
  %v295 = vld [vmem:[%s2 + $0x30] sm:$0xf]
  %v296 = vld [vmem:[%s2 + $0x34] sm:$0xf]
  %v297 = vld [vmem:[%s2 + $0x38] sm:$0xf]
  %v298 = vld [vmem:[%s2 + $0x3c] sm:$0xf]
  %v299 = vld [vmem:[%s3] sm:$0x1]
  %v301 = vlaneseq
  %v302 = vshrl.u32 %v301, 7
  %v303 = vsub.s32 0, %v302
  %v304 = vrot.slane %v299, %v303
  %v322 = vunpack.c.l.b16 %v283
  %v323 = vunpack.c.l.b16 %v284
  %v324 = vunpack.c.l.b16 %v285
  %v325 = vunpack.c.l.b16 %v286
  %v326 = vunpack.c.l.b16 %v287
  %v327 = vunpack.c.l.b16 %v288
  %v328 = vunpack.c.l.b16 %v289
  %v329 = vunpack.c.l.b16 %v290
  %v330 = vunpack.c.l.b16 %v291
  %v331 = vunpack.c.l.b16 %v292
  %v332 = vunpack.c.l.b16 %v293
  %v333 = vunpack.c.l.b16 %v294
  %v334 = vunpack.c.l.b16 %v295
  %v335 = vunpack.c.l.b16 %v296
  %v336 = vunpack.c.l.b16 %v297
  %v337 = vunpack.c.l.b16 %v298
  %v338 = vpack.c.b16 %v323, %v322
  %v339 = vpack.c.b16 %v325, %v324
  %v340 = vpack.c.b16 %v327, %v326
  %v341 = vpack.c.b16 %v329, %v328
  %v342 = vpack.c.b16 %v331, %v330
  %v343 = vpack.c.b16 %v333, %v332
  %v344 = vpack.c.b16 %v335, %v334
  %v345 = vpack.c.b16 %v337, %v336
  %354 = vmatprep.subr.bf16.mxu0 0
  %355 = vmatpush1.bf16.msra.mxu0 %v345
  %356 = vmatprep.subr.bf16.mxu0 0
  %357 = vmatpush1.bf16.msra.mxu0 %v344
  %358 = vmatprep.subr.bf16.mxu0 0
  %359 = vmatpush1.bf16.msra.mxu0 %v343
  %360 = vmatprep.subr.bf16.mxu0 0
  %361 = vmatpush1.bf16.msra.mxu0 %v342
  %362 = vmatprep.subr.bf16.mxu0 0
  %363 = vmatpush1.bf16.msra.mxu0 %v341
  %364 = vmatprep.subr.bf16.mxu0 0
  %365 = vmatpush1.bf16.msra.mxu0 %v340
  %366 = vmatprep.subr.bf16.mxu0 0
  %367 = vmatpush1.bf16.msra.mxu0 %v339
  %368 = vmatprep.subr.bf16.mxu0 0
  %369 = vmatpush1.bf16.msra.mxu0 %v338
  %370 = vmatprep.subr.bf16.mxu0 0
  %371 = vmatpush2.bf16.msra.mxu0 0
  %372 = vmatprep.subr.bf16.mxu0 0
  %373 = vmatpush2.bf16.msra.mxu0 0
  %374 = vmatprep.subr.bf16.mxu0 0
  %375 = vmatpush2.bf16.msra.mxu0 0
  %376 = vmatprep.subr.bf16.mxu0 0
  %377 = vmatpush2.bf16.msra.mxu0 0
  %378 = vmatprep.subr.bf16.mxu0 0
  %379 = vmatpush2.bf16.msra.mxu0 0
  %380 = vmatprep.subr.bf16.mxu0 0
  %381 = vmatpush2.bf16.msra.mxu0 0
  %382 = vmatprep.subr.bf16.mxu0 0
  %383 = vmatpush2.bf16.msra.mxu0 0
  %384 = vmatprep.subr.bf16.mxu0 0
  %385 = vmatpush2.bf16.msra.mxu0 0
  %386 = vmatprep.mubr.bf16.mxu0 0
  %387 = vmatmul.mubr.bf16.gmra.mxu0 %v282
  %v388 = vpop.f32.mrf.mxu0
  %v389 = vadd.f32 %v304, %v388
  %v390 = vpop.f32.mrf.mxu0
  %v391 = vpop.f32.mrf.mxu0
  %v392 = vpop.f32.mrf.mxu0
  %393 = vdwg.mxu0
  %394 = vst [vmem:[%s4] sm:$0xff] %v389
  // Predicated region
  $region18: #{model1_forward.1} parent=0 // pred_check
    _
  $region19: #{model1_forward.1} parent=0 // pred_check_branch
    %396 = sbr.rel (0) target = $region21
  $region20: #{model1_forward.1} parent=0 // pred_region
    _
  $region21: #{model1_forward.1} parent=0 // pred_fallthru
    _
  // Predicated region
  $region22: #{model1_forward.1} parent=0 // pred_check
    _
  $region23: #{model1_forward.1} parent=0 // pred_check_branch
    %398 = sbr.rel (0) target = $region25
  $region24: #{model1_forward.1} parent=0 // pred_region
    _
  $region25: #{model1_forward.1} parent=0 // pred_fallthru
    _

</llo_original>
